<compile_context>
chip_gen: v6e
topology: v6e:2x2x1
jax: 0.10.0
libtpu: 0.0.40
codegen_flags: <defaults>
</compile_context>

<pallas_src>
import functools

import jax
import jax.numpy as jnp
from jax.experimental import pallas as pl
from jax.experimental.pallas import tpu as pltpu

LANE = 128


def _row_granule(dtype) -> int:
    """Second-minor (sublane) tiling granule for a dtype."""
    itemsize = jnp.dtype(dtype).itemsize
    if itemsize >= 4:
        return 8
    if itemsize == 2:
        return 16
    return 32


def _default_block_rows(itemsize: int) -> int:
    """~2 MiB blocks per input per buffer (4 MiB on v7x's faster HBM)."""
    try:
        kind = jax.devices()[0].device_kind.lower()
    except Exception:  # pragma: no cover - defensive
        kind = ""
    target_bytes = (4 << 20) if ("v7" in kind or "7x" in kind) else (2 << 20)
    return max(8, target_bytes // (LANE * itemsize))


def _sse_kernel(a_ref, b_ref, o_ref, *, rows, tr, spc):
    """Accumulate sum((a - b)^2) of the streamed blocks into o_ref (1, 8, 128)."""
    c = pl.program_id(0)          # core / parallel axis
    i = pl.program_id(1)          # reduction axis (streams row blocks)

    @pl.when(i == 0)
    def _init():
        o_ref[...] = jnp.zeros_like(o_ref)

    # Native-dtype load, f32 upcast + squared difference on the VPU.
    d = a_ref[...].astype(jnp.float32) - b_ref[...].astype(jnp.float32)
    sq = d * d                                           # (tr, 128) f32

    blk = c * spc + i                                    # logical block id

    @pl.when(blk * tr + tr <= rows)                      # hot path: fully in-bounds
    def _acc_full():
        part = jnp.sum(sq.reshape(tr // 8, 8, LANE), axis=0)   # VALU tree add
        o_ref[...] += part.reshape(1, 8, LANE)

    @pl.when(blk * tr + tr > rows)                       # edge / padded block: mask rows
    def _acc_edge():
        row_ids = jax.lax.broadcasted_iota(jnp.int32, (tr, LANE), 0) + blk * tr
        sqm = jnp.where(row_ids < rows, sq, 0.0)
        part = jnp.sum(sqm.reshape(tr // 8, 8, LANE), axis=0)
        o_ref[...] += part.reshape(1, 8, LANE)


def rate_distortion_loss(original, reconstructed, lamb, *, block_rows=None):
    """loss = lamb * mean((original - reconstructed)**2); rate term R is 0."""
    assert original.shape == reconstructed.shape, (original.shape, reconstructed.shape)
    a = original.reshape(-1)          # free (bitcast) reshape, native dtype kept
    b = reconstructed.reshape(-1)
    n = a.size
    if n == 0:
        # torch nn.MSELoss on empty input yields NaN; mirror that.
        return jnp.asarray(lamb, jnp.float32) * jnp.float32(jnp.nan)

    # Only >32-bit dtypes (rare) are downcast in the wrapper; bf16/fp8/f32 stream natively.
    if jnp.dtype(a.dtype).itemsize > 4:
        a = a.astype(jnp.float32)
    if jnp.dtype(b.dtype).itemsize > 4:
        b = b.astype(jnp.float32)

    # Lane-ragged tail (< 128 elements): tiny jnp reduction, no full-array pad copy.
    n_main = (n // LANE) * LANE
    if n_main != n:
        ta = a[n_main:].astype(jnp.float32)
        tb = b[n_main:].astype(jnp.float32)
        tail_sse = jnp.sum((ta - tb) ** 2)
    else:
        tail_sse = jnp.float32(0.0)

    if n_main == 0:
        sse = tail_sse
    else:
        rows = n_main // LANE
        a2 = (a if n_main == n else a[:n_main]).reshape(rows, LANE)
        b2 = (b if n_main == n else b[:n_main]).reshape(rows, LANE)

        granule = max(_row_granule(a2.dtype), _row_granule(b2.dtype))
        itemsize = max(jnp.dtype(a2.dtype).itemsize, jnp.dtype(b2.dtype).itemsize)
        if block_rows is None:
            block_rows = _default_block_rows(itemsize)
        rows_g = ((rows + granule - 1) // granule) * granule
        tr = min(max(granule, (block_rows // granule) * granule), rows_g)

        blocks = pl.cdiv(rows, tr)
        nc = 2 if blocks > 1 else 1               # 2-way split feeds both v7x TensorCores
        spc = pl.cdiv(blocks, nc)                 # grid steps per core

        def in_map(c, i):
            # Clamp so padded steps re-read (and fully mask) the last real block.
            return (jnp.minimum(c * spc + i, blocks - 1), 0)

        partials = pl.pallas_call(
            functools.partial(_sse_kernel, rows=rows, tr=tr, spc=spc),
            out_shape=jax.ShapeDtypeStruct((nc, 8, LANE), jnp.float32),
            grid=(nc, spc),
            in_specs=[
                pl.BlockSpec((tr, LANE), in_map),           # original block
                pl.BlockSpec((tr, LANE), in_map),           # reconstructed block
            ],
            out_specs=pl.BlockSpec((1, 8, LANE), lambda c, i: (c, 0, 0)),
            compiler_params=pltpu.CompilerParams(
                dimension_semantics=("parallel", "arbitrary"),
            ),
        )(a2, b2)
        sse = jnp.sum(partials) + tail_sse

    # Apply lamb / N outside the kernel (lamb may be a traced scalar).
    return jnp.asarray(lamb, jnp.float32) * (sse / n)


def _reference(original, reconstructed, lamb):
    d = original.astype(jnp.float32) - reconstructed.astype(jnp.float32)
    return jnp.asarray(lamb, jnp.float32) * jnp.mean(d * d)


if __name__ == "__main__":
    key = jax.random.PRNGKey(0)
    ks = jax.random.split(key, 8)
    lamb = 0.01

    # Case 1: nominal image-compression shapes (128-multiple element count -> zero-copy path).
    o1 = jax.random.normal(ks[0], (2, 4, 16, 16), jnp.float32)
    r1 = o1 + 0.1 * jax.random.normal(ks[1], (2, 4, 16, 16), jnp.float32)
    l1 = jax.block_until_ready(rate_distortion_loss(o1, r1, lamb))
    ref1 = _reference(o1, r1, lamb)
    assert l1.shape == () and bool(jnp.isfinite(l1))
    assert bool(jnp.allclose(l1, ref1, rtol=1e-5, atol=1e-8)), (l1, ref1)

    # Case 2: multi-block grid + 2-way core split + row-ragged edge block.
    o2 = jax.random.normal(ks[2], (4, 3, 96, 96), jnp.float32)
    r2 = o2 + 0.05 * jax.random.normal(ks[3], (4, 3, 96, 96), jnp.float32)
    l2 = jax.block_until_ready(rate_distortion_loss(o2, r2, 0.1, block_rows=128))
    ref2 = _reference(o2, r2, 0.1)
    assert bool(jnp.allclose(l2, ref2, rtol=1e-5, atol=1e-8)), (l2, ref2)

    # Case 3: bf16 inputs streamed in native dtype (in-kernel upcast, (16,128) granule).
    o3 = jax.random.normal(ks[4], (2, 3, 32, 32), jnp.float32).astype(jnp.bfloat16)
    r3 = (o3.astype(jnp.float32)
          + 0.1 * jax.random.normal(ks[5], (2, 3, 32, 32), jnp.float32)).astype(jnp.bfloat16)
    l3 = jax.block_until_ready(rate_distortion_loss(o3, r3, lamb, block_rows=16))
    ref3 = _reference(o3, r3, lamb)
    assert bool(jnp.allclose(l3, ref3, rtol=1e-3, atol=1e-7)), (l3, ref3)

    # Case 4: lane-ragged element count (tail folded in with a tiny jnp sum).
    o4 = jax.random.normal(ks[6], (2, 3, 17, 19), jnp.float32)
    r4 = o4 + 0.05 * jax.random.normal(ks[7], (2, 3, 17, 19), jnp.float32)
    l4 = jax.block_until_ready(rate_distortion_loss(o4, r4, 0.1))
    ref4 = _reference(o4, r4, 0.1)
    assert bool(jnp.allclose(l4, ref4, rtol=1e-5, atol=1e-8)), (l4, ref4)

    print("KERNEL_OK")
</pallas_src>

<mosaic_0001>
module attributes {stable_mosaic.version = 11 : i64} {
  func.func @_sse_kernel(%arg0: i32, %arg1: i32, %arg2: memref<16x128xf32, #tpu.memory_space<vmem>>, %arg3: memref<16x128xf32, #tpu.memory_space<vmem>>, %arg4: memref<1x8x128xf32, #tpu.memory_space<vmem>>) attributes {dimension_semantics = [#tpu.dimension_semantics<parallel>, #tpu.dimension_semantics<arbitrary>], iteration_bounds = array<i64: 1, 1>, scalar_prefetch = 0 : i64, scratch_operands = 0 : i64, tpu.core_type = #tpu.core_type<tc>, window_params = [{transform_indices = @transform_0, window_bounds = array<i64: 16, 128>}, {transform_indices = @transform_1, window_bounds = array<i64: 16, 128>}, {transform_indices = @transform_2, window_bounds = array<i64: 1, 8, 128>}]} {
    %c0_i32 = arith.constant 0 : i32
    %0 = arith.cmpi eq, %arg1, %c0_i32 : i32
    %1 = arith.extui %0 : i1 to i32
    %c0_i32_0 = arith.constant 0 : i32
    %2 = arith.cmpi ne, %1, %c0_i32_0 : i32
    scf.if %2 {
      %cst = arith.constant 0.000000e+00 : f32
      %19 = vector.broadcast %cst : f32 to vector<1x8x128xf32>
      %c0_11 = arith.constant 0 : index
      %c0_12 = arith.constant 0 : index
      %c0_13 = arith.constant 0 : index
      %20 = vector.load %arg4[%c0_11, %c0_12, %c0_13] : memref<1x8x128xf32, #tpu.memory_space<vmem>>, vector<1x8x128xf32>
      tpu.vector_store %arg4[%c0_11, %c0_12, %c0_13], %19 {strides = array<i32>} : memref<1x8x128xf32, #tpu.memory_space<vmem>>, vector<1x8x128xf32>,
    } else {
    }
    %c0 = arith.constant 0 : index
    %c0_1 = arith.constant 0 : index
    %3 = vector.load %arg2[%c0, %c0_1] : memref<16x128xf32, #tpu.memory_space<vmem>>, vector<16x128xf32>
    %c0_2 = arith.constant 0 : index
    %c0_3 = arith.constant 0 : index
    %4 = vector.load %arg3[%c0_2, %c0_3] : memref<16x128xf32, #tpu.memory_space<vmem>>, vector<16x128xf32>
    %5 = arith.subf %3, %4 : vector<16x128xf32>
    %6 = arith.mulf %5, %5 : vector<16x128xf32>
    %c1_i32 = arith.constant 1 : i32
    %7 = arith.muli %arg0, %c1_i32 : i32
    %8 = arith.addi %7, %arg1 : i32
    %c16_i32 = arith.constant 16 : i32
    %9 = arith.muli %8, %c16_i32 : i32
    %c16_i32_4 = arith.constant 16 : i32
    %10 = arith.addi %9, %c16_i32_4 : i32
    %c16_i32_5 = arith.constant 16 : i32
    %11 = arith.cmpi sle, %10, %c16_i32_5 : i32
    %12 = arith.extui %11 : i1 to i32
    %c0_i32_6 = arith.constant 0 : i32
    %13 = arith.cmpi ne, %12, %c0_i32_6 : i32
    scf.if %13 {
      %19 = vector.shape_cast %6 : vector<16x128xf32> to vector<2x8x128xf32>
      %cst = arith.constant dense<0.000000e+00> : vector<8x128xf32>
      %20 = vector.multi_reduction <add>, %19, %cst [0] : vector<2x8x128xf32> to vector<8x128xf32>
      %c0_11 = arith.constant 0 : index
      %c0_12 = arith.constant 0 : index
      %c0_13 = arith.constant 0 : index
      %21 = vector.load %arg4[%c0_11, %c0_12, %c0_13] : memref<1x8x128xf32, #tpu.memory_space<vmem>>, vector<1x8x128xf32>
      %22 = vector.shape_cast %20 : vector<8x128xf32> to vector<1x8x128xf32>
      %23 = arith.addf %21, %22 : vector<1x8x128xf32>
      %c0_14 = arith.constant 0 : index
      %c0_15 = arith.constant 0 : index
      %c0_16 = arith.constant 0 : index
      %24 = vector.load %arg4[%c0_14, %c0_15, %c0_16] : memref<1x8x128xf32, #tpu.memory_space<vmem>>, vector<1x8x128xf32>
      tpu.vector_store %arg4[%c0_14, %c0_15, %c0_16], %23 {strides = array<i32>} : memref<1x8x128xf32, #tpu.memory_space<vmem>>, vector<1x8x128xf32>,
    } else {
    }
    %c16_i32_7 = arith.constant 16 : i32
    %14 = arith.muli %8, %c16_i32_7 : i32
    %c16_i32_8 = arith.constant 16 : i32
    %15 = arith.addi %14, %c16_i32_8 : i32
    %c16_i32_9 = arith.constant 16 : i32
    %16 = arith.cmpi sgt, %15, %c16_i32_9 : i32
    %17 = arith.extui %16 : i1 to i32
    %c0_i32_10 = arith.constant 0 : i32
    %18 = arith.cmpi ne, %17, %c0_i32_10 : i32
    scf.if %18 {
      %19 = tpu.iota {dimensions = array<i32: 0>} : vector<16x128xi32>
      %c16_i32_11 = arith.constant 16 : i32
      %20 = arith.muli %8, %c16_i32_11 : i32
      %21 = vector.broadcast %20 : i32 to vector<16x128xi32>
      %22 = arith.addi %19, %21 : vector<16x128xi32>
      %c16_i32_12 = arith.constant 16 : i32
      %23 = vector.broadcast %c16_i32_12 : i32 to vector<16x128xi32>
      %24 = arith.cmpi slt, %22, %23 : vector<16x128xi32>
      %cst = arith.constant 0.000000e+00 : f32
      %25 = vector.broadcast %cst : f32 to vector<16x128xf32>
      %26 = arith.select %24, %6, %25 : vector<16x128xi1>, vector<16x128xf32>
      %27 = vector.shape_cast %26 : vector<16x128xf32> to vector<2x8x128xf32>
      %cst_13 = arith.constant dense<0.000000e+00> : vector<8x128xf32>
      %28 = vector.multi_reduction <add>, %27, %cst_13 [0] : vector<2x8x128xf32> to vector<8x128xf32>
      %c0_14 = arith.constant 0 : index
      %c0_15 = arith.constant 0 : index
      %c0_16 = arith.constant 0 : index
      %29 = vector.load %arg4[%c0_14, %c0_15, %c0_16] : memref<1x8x128xf32, #tpu.memory_space<vmem>>, vector<1x8x128xf32>
      %30 = vector.shape_cast %28 : vector<8x128xf32> to vector<1x8x128xf32>
      %31 = arith.addf %29, %30 : vector<1x8x128xf32>
      %c0_17 = arith.constant 0 : index
      %c0_18 = arith.constant 0 : index
      %c0_19 = arith.constant 0 : index
      %32 = vector.load %arg4[%c0_17, %c0_18, %c0_19] : memref<1x8x128xf32, #tpu.memory_space<vmem>>, vector<1x8x128xf32>
      tpu.vector_store %arg4[%c0_17, %c0_18, %c0_19], %31 {strides = array<i32>} : memref<1x8x128xf32, #tpu.memory_space<vmem>>, vector<1x8x128xf32>,
    } else {
    }
    return
  }
  func.func @transform_0(%arg0: i32, %arg1: i32) -> (i32, i32) {
    %c1_i32 = arith.constant 1 : i32
    %0 = arith.muli %arg0, %c1_i32 : i32
    %1 = arith.addi %0, %arg1 : i32
    %c0_i32 = arith.constant 0 : i32
    %2 = arith.minsi %1, %c0_i32 : i32
    %c0_i32_0 = arith.constant 0 : i32
    %c0_i32_1 = arith.constant 0 : i32
    return %2, %c0_i32_0 : i32, i32
  }
  func.func @transform_1(%arg0: i32, %arg1: i32) -> (i32, i32) {
    %c1_i32 = arith.constant 1 : i32
    %0 = arith.muli %arg0, %c1_i32 : i32
    %1 = arith.addi %0, %arg1 : i32
    %c0_i32 = arith.constant 0 : i32
    %2 = arith.minsi %1, %c0_i32 : i32
    %c0_i32_0 = arith.constant 0 : i32
    %c0_i32_1 = arith.constant 0 : i32
    return %2, %c0_i32_0 : i32, i32
  }
  func.func @transform_2(%arg0: i32, %arg1: i32) -> (i32, i32, i32) {
    %c0_i32 = arith.constant 0 : i32
    %c0_i32_0 = arith.constant 0 : i32
    %c0_i32_1 = arith.constant 0 : i32
    return %arg0, %c0_i32, %c0_i32_0 : i32, i32, i32
  }
}

</mosaic_0001>

<llo_original>
// kernel: tpu_custom_call.1
$region0: #{tpu_custom_call.1}
  #allocation0 [shape = 'u32[]', space=smem, size = 0x4, offset = 0x4, fixed_abs, tag = 'smem constant byte address 0x4 - core index']
  #allocation1 [shape = 'u32[144,128]{1,0:T(1,128)}', space=vmem, size = 0x12000, scoped, tag = 'internal scratch']
  %s0 = inlined_call_operand.hbm [shape: f32[16,128], index: 0, kind: input, shape index: {}]
  %s1 = inlined_call_operand.hbm [shape: f32[16,128], index: 1, kind: input, shape index: {}]
  %s2 = inlined_call_operand.hbm [shape: f32[1,8,128], index: 2, kind: output, shape index: {}]
  %s3 = sld [smem:[#allocation0]]
  $region38: #{tpu_custom_call.1} parent=0
    _
  %s5 = ssub.s32 1, %s3
  %s6 = scalar_select 0, %s5, %s3
  $region1: #{tpu_custom_call.1} parent=0
    #allocation2 [shape = 'u8[8192]{0}', space=vmem, size = 0x2000, scoped, tag = 'input window, operand 0, single buffered']
    #allocation3 [shape = 's32[1]{0}', space=sflag, size = 0x4, scoped, tag = 'scoped memory for tpu_custom_call.1']
    #allocation4 [shape = 's32[1]{0}', space=sflag, size = 0x4, scoped, tag = 'scoped memory for tpu_custom_call.1']
    #allocation5 [shape = 'u8[8192]{0}', space=vmem, size = 0x2000, scoped, tag = 'input window, operand 1, single buffered']
    #allocation6 [shape = 's32[1]{0}', space=sflag, size = 0x4, scoped, tag = 'scoped memory for tpu_custom_call.1']
    #allocation7 [shape = 'u8[4096]{0}', space=vmem, size = 0x1000, scoped, tag = 'output window, operand 0, single buffered']
    %7 = vsyncpa [#allocation3], 0
    %8 = vsyncpa [#allocation6], 0
    %9 = vsyncpa [#allocation4], 0
    // Predicated region
    $region2: #{tpu_custom_call.1} parent=1 // pred_check
      _
    $region3: #{tpu_custom_call.1} parent=1 // pred_check_branch
      %11 = sbr.rel (0) target = $region5
    $region4: #{tpu_custom_call.1} parent=1 // pred_region
      %s12 = sadd.s32 0, 0
      %p13 = scmp.lt.s32.totalorder %s12, 0
      %s14 = scalar_select %p13, %s12, 0
      %s15 = smul.u32 2, %s14
      %s17 = ssub.s32 256, 256
      %18 = vsyncadd [#allocation3], %s17
      %s19 = smul.addr %s15, 128
      %s20 = scalar_lea.hbm %s0, %s19
      %s21 = sshll.u32 [#allocation2], 4
      %s22 = int_to_ptr.vmem [resolvable:$true] %s21
      %27 = dma.hbm_to_vmem [thread:$0]  %s20, 256, %s22, [#allocation3], 128, 128, 8
    $region5: #{tpu_custom_call.1} parent=1 // pred_fallthru
      _
    // Predicated region
    $region6: #{tpu_custom_call.1} parent=1 // pred_check
      _
    $region7: #{tpu_custom_call.1} parent=1 // pred_check_branch
      %29 = sbr.rel (0) target = $region9
    $region8: #{tpu_custom_call.1} parent=1 // pred_region
      %s30 = sadd.s32 0, 0
      %p31 = scmp.lt.s32.totalorder %s30, 0
      %s32 = scalar_select %p31, %s30, 0
      %s33 = smul.u32 2, %s32
      %s35 = ssub.s32 256, 256
      %36 = vsyncadd [#allocation6], %s35
      %s37 = smul.addr %s33, 128
      %s38 = scalar_lea.hbm %s1, %s37
      %s39 = sshll.u32 [#allocation5], 4
      %s40 = int_to_ptr.vmem [resolvable:$true] %s39
      %45 = dma.hbm_to_vmem [thread:$0]  %s38, 256, %s40, [#allocation6], 128, 128, 8
    $region9: #{tpu_custom_call.1} parent=1 // pred_fallthru
      _
    // Predicated region
    $region10: #{tpu_custom_call.1} parent=1 // pred_check
      _
    $region11: #{tpu_custom_call.1} parent=1 // pred_check_branch
      %47 = sbr.rel (0) target = $region13
    $region12: #{tpu_custom_call.1} parent=1 // pred_region
      %48 = dma.done [#allocation3], 256
    $region13: #{tpu_custom_call.1} parent=1 // pred_fallthru
      _
    // Predicated region
    $region14: #{tpu_custom_call.1} parent=1 // pred_check
      _
    $region15: #{tpu_custom_call.1} parent=1 // pred_check_branch
      %50 = sbr.rel (0) target = $region17
    $region16: #{tpu_custom_call.1} parent=1 // pred_region
      %51 = dma.done [#allocation6], 256
    $region17: #{tpu_custom_call.1} parent=1 // pred_fallthru
      _
    %s52 = sadd.s32 0, 0
    %p53 = scmp.lt.s32.totalorder %s52, 0
    %s54 = scalar_select %p53, %s52, 0
    %s55 = smul.u32 2, %s54
    %s56 = sadd.s32 0, 0
    %p57 = scmp.lt.s32.totalorder %s56, 0
    %s58 = scalar_select %p57, %s56, 0
    %s59 = smul.u32 2, %s58
    %p60 = scmp.eq.s32.totalorder 0, 0
    // Predicated region
    $region18: #{tpu_custom_call.1} parent=1 // pred_check
      %p61 = pneg %p60
    $region19: #{tpu_custom_call.1} parent=1 // pred_check_branch
      %63 = sbr.rel (%p61) target = $region21
    $region20: #{tpu_custom_call.1} parent=1 // pred_region
      %64 = vst [vmem:[#allocation7] sm:$0xff] 0.0
    $region21: #{tpu_custom_call.1} parent=1 // pred_fallthru
      _
    %v65 = vld [vmem:[#allocation2] sm:$0xff]
    %v66 = vld [vmem:[#allocation2 + $0x8] sm:$0xff]
    %v67 = vld [vmem:[#allocation5] sm:$0xff]
    %v68 = vld [vmem:[#allocation5 + $0x8] sm:$0xff]
    %v69 = vsub.f32 %v65, %v67
    %v70 = vsub.f32 %v66, %v68
    %v71 = vmul.f32 %v69, %v69
    %v72 = vmul.f32 %v70, %v70
    %s73 = sadd.s32 0, 0
    %s74 = smul.u32 %s73, 16
    %s75 = sadd.s32 %s74, 16
    %p76 = scmp.le.s32.totalorder %s75, 16
    // Predicated region
    $region22: #{tpu_custom_call.1} parent=1 // pred_check
      %p77 = pneg %p76
    $region23: #{tpu_custom_call.1} parent=1 // pred_check_branch
      %79 = sbr.rel (%p77) target = $region25
    $region24: #{tpu_custom_call.1} parent=1 // pred_region
      %v80 = vadd.f32 %v71, %v72
      %v81 = vld [vmem:[#allocation7] sm:$0xff]
      %v82 = vadd.f32 %v81, %v80
      %83 = vst [vmem:[#allocation7] sm:$0xff] %v82
    $region25: #{tpu_custom_call.1} parent=1 // pred_fallthru
      _
    %p84 = scmp.gt.s32.totalorder %s75, 16
    // Predicated region
    $region26: #{tpu_custom_call.1} parent=1 // pred_check
      %p85 = pneg %p84
    $region27: #{tpu_custom_call.1} parent=1 // pred_check_branch
      %87 = sbr.rel (%p85) target = $region29
    $region28: #{tpu_custom_call.1} parent=1 // pred_region
      %v88 = vlaneseq
      %v89 = vshrl.u32 %v88, 7
      %v90 = vadd.s32 %v89, 8
      %v91 = vstv %s74
      %v92 = vadd.s32 %v89, %v91
      %v93 = vadd.s32 %v90, %v91
      %vm94 = vcmp.lt.s32.totalorder %v92, 16
      %vm95 = vcmp.lt.s32.totalorder %v93, 16
      %v96 = vsel %vm94, %v71, 0.0
      %v97 = vsel %vm95, %v72, 0.0
      %v98 = vadd.f32 %v96, %v97
      %v99 = vld [vmem:[#allocation7] sm:$0xff]
      %v100 = vadd.f32 %v99, %v98
      %101 = vst [vmem:[#allocation7] sm:$0xff] %v100
    $region29: #{tpu_custom_call.1} parent=1 // pred_fallthru
      _
    // Predicated region
    $region30: #{tpu_custom_call.1} parent=1 // pred_check
      _
    $region31: #{tpu_custom_call.1} parent=1 // pred_check_branch
      %103 = sbr.rel (0) target = $region33
    $region32: #{tpu_custom_call.1} parent=1 // pred_region
      %s105 = ssub.s32 128, 128
      %106 = vsyncadd [#allocation4], %s105
      %s108 = sshll.u32 [#allocation7], 4
      %s109 = int_to_ptr.vmem [resolvable:$true] %s108
      %111 = dma.vmem_to_hbm [thread:$0]  %s109, 128, %s2, [#allocation4]
    $region33: #{tpu_custom_call.1} parent=1 // pred_fallthru
      _
    // Predicated region
    $region34: #{tpu_custom_call.1} parent=1 // pred_check
      _
    $region35: #{tpu_custom_call.1} parent=1 // pred_check_branch
      %113 = sbr.rel (0) target = $region37
    $region36: #{tpu_custom_call.1} parent=1 // pred_region
      %114 = dma.done [#allocation4], 128
    $region37: #{tpu_custom_call.1} parent=1 // pred_fallthru
      _
    %115 = vsyncpa [#allocation3], 1
    %116 = vsyncpa [#allocation6], 1
    %117 = vsyncpa [#allocation4], 1

</llo_original>
